<compile_context>
chip_gen: v5e
topology: v5e:2x2
jax: 0.10.0
libtpu: 0.0.40
codegen_flags: <defaults>
</compile_context>

<pallas_src>
import functools

import jax
import jax.numpy as jnp
from jax.experimental import pallas as pl
from jax.experimental.pallas import tpu as pltpu


def _round_up(x, m):
    return (x + m - 1) // m * m


def _vmem_capacity_bytes():
    """Physical VMEM of the current chip; conservative 64 MiB fallback."""
    try:
        info = pltpu.get_tpu_info()
        cap = getattr(info, "vmem_capacity_bytes", None)
        if cap:
            return int(cap)
    except Exception:
        pass
    return 64 * 1024 * 1024


def _decoder_zx_kernel(z_ref, wcat_ref, sf_ref, mu_ref, *,
                       n_latent, n_nuisance, k_total, k_pad, assume_one_hot):
    z = z_ref[...]                                   # (tb, n_in) f32
    z0 = z[:, :n_latent].astype(jnp.bfloat16)        # cast early: halves live vregs
    noh = z[:, n_latent:]                            # (tb, n_nuisance) f32

    if assume_one_hot:
        # Nuisance block assumed to already be an exact one-hot encoding.
        ind = noh.astype(jnp.bfloat16)
    else:
        # torch.argmax (first max) emulation via masked index-min.
        col = jax.lax.broadcasted_iota(jnp.int32, noh.shape, 1)
        maxv = jnp.max(noh, axis=-1, keepdims=True)
        ids = jnp.min(jnp.where(noh == maxv, col, n_nuisance),
                      axis=-1, keepdims=True)
        ind = (col == ids).astype(jnp.bfloat16)

    # Fused bf16 LHS: [z0 | ind_s * z0 per site | ind | zero pad] -> (tb, k_pad)
    blocks = [z0]
    for s in range(n_nuisance):                      # n_nuisance is small & static
        blocks.append(ind[:, s:s + 1] * z0)          # exact: ind is 0/1
    blocks.append(ind)
    if k_pad > k_total:
        blocks.append(jnp.zeros((z.shape[0], k_pad - k_total), jnp.bfloat16))
    m = jnp.concatenate(blocks, axis=-1)

    # Single MXU push: logits = x1 + x2 + offsets (padded gene columns = -1e30).
    logits = jnp.dot(m, wcat_ref[...], preferred_element_type=jnp.float32)

    # Softmax over the gene axis (f32 epilogue). size_factor is folded into the
    # (tb, 1) normalization scale; exact divide (approx recip buys nothing here).
    rmax = jnp.max(logits, axis=-1, keepdims=True)
    e = jnp.exp(logits - rmax)
    scale = sf_ref[...] / jnp.sum(e, axis=-1, keepdims=True)
    mu_ref[...] = (e * scale).astype(mu_ref.dtype)


def prepare_decoder_zx_weights(w, amat_site, offsets):
    """Build the fused bf16 weight ONCE (hoist out of the per-forward call)."""
    n_latent, n_out = w.shape
    n_nuisance = amat_site.shape[0]
    k_total = n_latent * (n_nuisance + 1) + n_nuisance
    k_pad = _round_up(k_total, 128)          # aligned MXU contraction

    # Lane-pad the gene axis only when it is tiny (< 128); for production gene
    # counts write unpadded output and skip the wrapper slice copy entirely.
    if n_out >= 128 or n_out % 128 == 0:
        n_out_eff = n_out
        pad = 0
    else:
        n_out_eff = 128
        pad = 128 - n_out

    NEG = jnp.float32(-1e30)                 # padded logits -> exp() == 0
    w_p = jnp.pad(w.astype(jnp.float32), ((0, 0), (0, pad)))
    a_p = jnp.pad(
        amat_site.astype(jnp.float32).reshape(n_nuisance * n_latent, n_out),
        ((0, 0), (0, pad)))
    o_p = jnp.pad(offsets.astype(jnp.float32), ((0, 0), (0, pad)),
                  constant_values=NEG)
    w_cat = jnp.concatenate([w_p, a_p, o_p], axis=0)
    w_cat = jnp.pad(w_cat, ((0, k_pad - k_total), (0, 0))).astype(jnp.bfloat16)

    return dict(w_cat=w_cat, n_latent=n_latent, n_nuisance=n_nuisance,
                n_out=n_out, n_out_eff=n_out_eff, k_total=k_total, k_pad=k_pad)


def decoder_zx_forward(z, size_factor, w, amat_site, offsets, px_r, *,
                       n_nuisance, tb=256, assume_one_hot=True,
                       out_dtype=jnp.bfloat16, prepared=None):
    """Returns (mu, theta) of the NegativeBinomial parameterization."""
    if prepared is None:
        prepared = prepare_decoder_zx_weights(w, amat_site, offsets)
    assert prepared["n_nuisance"] == n_nuisance

    B, n_in = z.shape
    n_latent = prepared["n_latent"]
    n_out = prepared["n_out"]
    n_out_eff = prepared["n_out_eff"]
    k_total = prepared["k_total"]
    k_pad = prepared["k_pad"]
    w_cat = prepared["w_cat"]
    assert n_in == n_latent + n_nuisance

    out_bytes = jnp.dtype(out_dtype).itemsize

    # ---- batch tile sizing ----------------------------------------------
    B8 = _round_up(B, 8)
    vmem_cap = _vmem_capacity_bytes()
    vmem_budget = int(0.8 * vmem_cap)

    # Single-buffered resident weight + per-row cost: 2x z (f32) + sf,
    # 2x mu output buffers, bf16 LHS, ~3 full-row f32 temporaries.
    w_bytes = k_pad * n_out_eff * 2
    per_row = (2 * n_in * 4 + 2 * 4
               + 2 * n_out_eff * out_bytes
               + k_pad * 2
               + 3 * n_out_eff * 4)
    tb_cap = max(8, ((max(vmem_budget - w_bytes, per_row * 8)) // per_row) // 8 * 8)

    tb = max(8, min(tb, tb_cap, B8))
    # Keep >=2 grid steps so the "parallel" batch axis can split across the
    # two TensorCores on v7x (and megacore parts generally).
    if B8 >= 16:
        tb = min(tb, _round_up(pl.cdiv(B8, 2), 8))
    B_pad = _round_up(B8, tb)

    z = z.astype(jnp.float32)
    size_factor = size_factor.astype(jnp.float32)
    if B_pad != B:
        z = jnp.pad(z, ((0, B_pad - B), (0, 0)))
        size_factor = jnp.pad(size_factor, ((0, B_pad - B), (0, 0)))

    kernel = functools.partial(_decoder_zx_kernel, n_latent=n_latent,
                               n_nuisance=n_nuisance, k_total=k_total,
                               k_pad=k_pad, assume_one_hot=assume_one_hot)

    need = w_bytes + tb * per_row
    vmem_limit = int(min(vmem_budget, max(2 * need, 32 * 1024 * 1024)))
    vmem_limit = max(vmem_limit, need + (4 << 20))   # never below what we need

    mu_p = pl.pallas_call(
        kernel,
        out_shape=jax.ShapeDtypeStruct((B_pad, n_out_eff), out_dtype),
        grid_spec=pltpu.PrefetchScalarGridSpec(
            num_scalar_prefetch=0,
            grid=(B_pad // tb,),
            in_specs=[
                pl.BlockSpec((tb, n_in), lambda i: (i, 0)),
                # Whole fused weight, resident in VMEM once (single buffer).
                pl.BlockSpec(memory_space=pltpu.MemorySpace.VMEM),
                pl.BlockSpec((tb, 1), lambda i: (i, 0)),
            ],
            out_specs=pl.BlockSpec((tb, n_out_eff), lambda i: (i, 0)),
        ),
        compiler_params=pltpu.CompilerParams(
            dimension_semantics=("parallel",),
            vmem_limit_bytes=vmem_limit),
    )(z, w_cat, size_factor)

    mu = mu_p
    if B_pad != B or n_out_eff != n_out:
        mu = mu_p[:B, :n_out]
    theta = jnp.exp(px_r)            # tiny per-gene dispersion, plain JAX
    return mu, theta


def _reference(z, size_factor, w, amat_site, offsets, px_r, n_nuisance):
    n_latent = z.shape[-1] - n_nuisance
    z0 = z[..., :n_latent]
    noh = z[..., n_latent:]
    x1 = z0 @ w
    ids = jnp.argmax(noh, axis=-1)
    As = amat_site[ids]
    x2 = jnp.sum(As * z0[..., None], axis=-2)
    mu = x1 + x2 + offsets[ids]
    mu = jax.nn.softmax(mu, axis=-1) * size_factor
    return mu, jnp.exp(px_r)


if __name__ == "__main__":
    # Small shapes consistent with the module.
    B, n_latent, n_nuisance, n_out = 16, 32, 4, 24
    n_in = n_latent + n_nuisance

    key = jax.random.PRNGKey(0)
    k1, k2, k3, k4, k5, k6, k7 = jax.random.split(key, 7)

    # Inputs: latent part is gaussian, nuisance part is a one-hot block.
    z_lat = jax.random.normal(k1, (B, n_latent), jnp.float32)
    nuis_ids = jax.random.randint(k2, (B,), 0, n_nuisance)
    z_oh = jax.nn.one_hot(nuis_ids, n_nuisance, dtype=jnp.float32)
    z = jnp.concatenate([z_lat, z_oh], axis=-1)                    # (B, n_in)
    size_factor = jnp.exp(jax.random.normal(k3, (B, 1), jnp.float32))

    # Parameters (shapes per DecoderZX.__init__ with linear_decoder=True).
    w = jax.random.normal(k4, (n_latent, n_out), jnp.float32) * 0.1
    amat_site = jax.random.normal(k5, (n_nuisance, n_latent, n_out), jnp.float32) * 0.1
    offsets = jax.random.normal(k6, (n_nuisance, n_out), jnp.float32)
    px_r = jax.random.normal(k7, (n_out,), jnp.float32)

    # Fused weight is precomputed ONCE and reused across forward calls.
    prepared = prepare_decoder_zx_weights(w, amat_site, offsets)

    mu, theta = decoder_zx_forward(z, size_factor, w, amat_site, offsets, px_r,
                                   n_nuisance=n_nuisance, prepared=prepared)
    jax.block_until_ready((mu, theta))

    mu_ref, theta_ref = _reference(z, size_factor, w, amat_site, offsets, px_r,
                                   n_nuisance)
    assert mu.shape == (B, n_out) and theta.shape == (n_out,)
    # bf16 MXU operands + bf16 output -> relaxed (still tight) tolerance.
    assert jnp.allclose(mu.astype(jnp.float32), mu_ref, atol=1e-3, rtol=5e-2), \
        float(jnp.max(jnp.abs(mu.astype(jnp.float32) - mu_ref)))
    assert jnp.allclose(theta, theta_ref, atol=1e-6, rtol=1e-6)

    # Ragged batch + explicit argmax fallback + f32 output path
    # (exercises padding/masking and the exact-semantics fallback).
    B2 = 13
    mu2, _ = decoder_zx_forward(z[:B2], size_factor[:B2], w, amat_site, offsets,
                                px_r, n_nuisance=n_nuisance, tb=8,
                                assume_one_hot=False, out_dtype=jnp.float32,
                                prepared=prepared)
    jax.block_until_ready(mu2)
    mu2_ref, _ = _reference(z[:B2], size_factor[:B2], w, amat_site, offsets,
                            px_r, n_nuisance)
    assert mu2.shape == (B2, n_out)
    assert jnp.allclose(mu2, mu2_ref, atol=1e-3, rtol=5e-2)

    print("KERNEL_OK")
</pallas_src>

<mosaic_0001>
module attributes {stable_mosaic.version = 11 : i64} {
  func.func @_decoder_zx_kernel(%arg0: i32, %arg1: memref<8x36xf32, #tpu.memory_space<vmem>>, %arg2: memref<256x128xbf16, #tpu.memory_space<vmem>>, %arg3: memref<8x1xf32, #tpu.memory_space<vmem>>, %arg4: memref<8x128xbf16, #tpu.memory_space<vmem>>) attributes {dimension_semantics = [#tpu.dimension_semantics<parallel>], iteration_bounds = array<i64: 2>, scalar_prefetch = 0 : i64, scratch_operands = 0 : i64, tpu.core_type = #tpu.core_type<tc>, window_params = [{transform_indices = @transform_0, window_bounds = array<i64: 8, 36>}, {pipeline_mode = #tpu.pipeline_mode<synchronous>, transform_indices = @transform_1, window_bounds = array<i64: 256, 128>}, {transform_indices = @transform_2, window_bounds = array<i64: 8, 1>}, {transform_indices = @transform_3, window_bounds = array<i64: 8, 128>}]} {
    %c0 = arith.constant 0 : index
    %c0_0 = arith.constant 0 : index
    %0 = vector.load %arg1[%c0, %c0_0] : memref<8x36xf32, #tpu.memory_space<vmem>>, vector<8x36xf32>
    %1 = vector.extract_strided_slice %0 {offsets = [0, 0], sizes = [8, 32], strides = [1, 1]} : vector<8x36xf32> to vector<8x32xf32>
    %2 = arith.truncf %1 : vector<8x32xf32> to vector<8x32xbf16>
    %3 = vector.extract_strided_slice %0 {offsets = [0, 32], sizes = [8, 4], strides = [1, 1]} : vector<8x36xf32> to vector<8x4xf32>
    %4 = arith.truncf %3 : vector<8x4xf32> to vector<8x4xbf16>
    %5 = vector.extract_strided_slice %4 {offsets = [0, 0], sizes = [8, 1], strides = [1, 1]} : vector<8x4xbf16> to vector<8x1xbf16>
    %6 = vector.broadcast %5 : vector<8x1xbf16> to vector<8x32xbf16>
    %7 = arith.mulf %6, %2 : vector<8x32xbf16>
    %8 = vector.extract_strided_slice %4 {offsets = [0, 1], sizes = [8, 1], strides = [1, 1]} : vector<8x4xbf16> to vector<8x1xbf16>
    %9 = vector.broadcast %8 : vector<8x1xbf16> to vector<8x32xbf16>
    %10 = arith.mulf %9, %2 : vector<8x32xbf16>
    %11 = vector.extract_strided_slice %4 {offsets = [0, 2], sizes = [8, 1], strides = [1, 1]} : vector<8x4xbf16> to vector<8x1xbf16>
    %12 = vector.broadcast %11 : vector<8x1xbf16> to vector<8x32xbf16>
    %13 = arith.mulf %12, %2 : vector<8x32xbf16>
    %14 = vector.extract_strided_slice %4 {offsets = [0, 3], sizes = [8, 1], strides = [1, 1]} : vector<8x4xbf16> to vector<8x1xbf16>
    %15 = vector.broadcast %14 : vector<8x1xbf16> to vector<8x32xbf16>
    %16 = arith.mulf %15, %2 : vector<8x32xbf16>
    %cst = arith.constant 0.000000e+00 : bf16
    %17 = vector.broadcast %cst : bf16 to vector<8x92xbf16>
    %18 = tpu.concatenate %2, %7, %10, %13, %16, %4, %17 in 1 : vector<8x32xbf16>, vector<8x32xbf16>, vector<8x32xbf16>, vector<8x32xbf16>, vector<8x32xbf16>, vector<8x4xbf16>, vector<8x92xbf16> -> vector<8x256xbf16>
    %c0_1 = arith.constant 0 : index
    %c0_2 = arith.constant 0 : index
    %19 = vector.load %arg2[%c0_1, %c0_2] : memref<256x128xbf16, #tpu.memory_space<vmem>>, vector<256x128xbf16>
    %cst_3 = arith.constant dense<0.000000e+00> : vector<8x128xf32>
    %20 = tpu.matmul %18, %19, %cst_3 {dimension_numbers = #tpu.dot_dimension_numbers<[1], [0], [0], [1], [0, 0, 1, 1], [], []>} : vector<8x256xbf16>, vector<256x128xbf16>, vector<8x128xf32> -> vector<8x128xf32>
    %cst_4 = arith.constant dense<0xFF800000> : vector<8xf32>
    %21 = vector.multi_reduction <maximumf>, %20, %cst_4 [1] : vector<8x128xf32> to vector<8xf32>
    %22 = vector.shape_cast %21 : vector<8xf32> to vector<8x1xf32>
    %23 = vector.broadcast %22 : vector<8x1xf32> to vector<8x128xf32>
    %24 = arith.subf %20, %23 : vector<8x128xf32>
    %25 = math.exp %24 : vector<8x128xf32>
    %c0_5 = arith.constant 0 : index
    %c0_6 = arith.constant 0 : index
    %26 = vector.load %arg3[%c0_5, %c0_6] : memref<8x1xf32, #tpu.memory_space<vmem>>, vector<8x1xf32>
    %cst_7 = arith.constant dense<0.000000e+00> : vector<8xf32>
    %27 = vector.multi_reduction <add>, %25, %cst_7 [1] : vector<8x128xf32> to vector<8xf32>
    %28 = vector.shape_cast %27 : vector<8xf32> to vector<8x1xf32>
    %29 = arith.divf %26, %28 : vector<8x1xf32>
    %30 = vector.broadcast %29 : vector<8x1xf32> to vector<8x128xf32>
    %31 = arith.mulf %25, %30 : vector<8x128xf32>
    %32 = arith.truncf %31 : vector<8x128xf32> to vector<8x128xbf16>
    %c0_8 = arith.constant 0 : index
    %c0_9 = arith.constant 0 : index
    %33 = vector.load %arg4[%c0_8, %c0_9] : memref<8x128xbf16, #tpu.memory_space<vmem>>, vector<8x128xbf16>
    tpu.vector_store %arg4[%c0_8, %c0_9], %32 {strides = array<i32>} : memref<8x128xbf16, #tpu.memory_space<vmem>>, vector<8x128xbf16>,
    return
  }
  func.func @transform_0(%arg0: i32) -> (i32, i32) {
    %c0_i32 = arith.constant 0 : i32
    %c0_i32_0 = arith.constant 0 : i32
    return %arg0, %c0_i32 : i32, i32
  }
  func.func @transform_1(%arg0: i32) -> (i32, i32) {
    %c0_i32 = arith.constant 0 : i32
    %c0_i32_0 = arith.constant 0 : i32
    %c0_i32_1 = arith.constant 0 : i32
    return %c0_i32, %c0_i32_0 : i32, i32
  }
  func.func @transform_2(%arg0: i32) -> (i32, i32) {
    %c0_i32 = arith.constant 0 : i32
    %c0_i32_0 = arith.constant 0 : i32
    return %arg0, %c0_i32 : i32, i32
  }
  func.func @transform_3(%arg0: i32) -> (i32, i32) {
    %c0_i32 = arith.constant 0 : i32
    %c0_i32_0 = arith.constant 0 : i32
    return %arg0, %c0_i32 : i32, i32
  }
}

</mosaic_0001>

<llo_original>
// kernel: tpu_custom_call.1
$region0: #{tpu_custom_call.1}
  #allocation0 [shape = 'u32[]', space=smem, size = 0x4, offset = 0x4, fixed_abs, tag = 'smem constant byte address 0x4 - core index']
  #allocation1 [shape = 'u32[72,128]{1,0:T(1,128)}', space=vmem, size = 0x9000, scoped, tag = 'internal scratch']
  %s0 = inlined_call_operand.vmem [shape: f32[16,36], index: 0, kind: input, shape index: {}]
  %s1 = inlined_call_operand.hbm [shape: bf16[256,128], index: 1, kind: input, shape index: {}]
  %s2 = inlined_call_operand.vmem [shape: f32[16,1], index: 2, kind: input, shape index: {}]
  %s3 = inlined_call_operand.hbm [shape: bf16[16,128], index: 3, kind: output, shape index: {}]
  %s4 = sld [smem:[#allocation0]]
  $region49: #{tpu_custom_call.1} parent=0
    _
  %s6 = ssub.s32 1, %s4
  %s7 = scalar_select 0, %s6, %s4
  $region1: #{tpu_custom_call.1} parent=0
    #allocation2 [shape = 'u8[65536]{0}', space=vmem, size = 0x10000, scoped, tag = 'input window, operand 1, single buffered']
    #allocation3 [shape = 's32[2]{0}', space=sflag, size = 0x8, scoped, tag = 'scoped memory for tpu_custom_call.1']
    #allocation4 [shape = 's32[2]{0}', space=sflag, size = 0x8, scoped, tag = 'scoped memory for tpu_custom_call.1']
    #allocation5 [shape = 'u8[4096]{0}', space=vmem, size = 0x1000, scoped, tag = 'output window, operand 0']
    %8 = vsyncpa [#allocation3], 0
    %9 = vsyncpa [#allocation4], 0
    %s10 = scalar_lea.sflag [#allocation4], 1
    %11 = vsyncpa %s10, 0
    loop: start=0, step=1, limit=4
    $region2: #{tpu_custom_call.1} parent=1 // loop_pre_header
      _
    $region3: #{tpu_custom_call.1} parent=1 // loop_header
      %s13 = sphi 0, %s17
      %p14 = scmp.ge.s32.totalorder %s13, 4
      %s23 = sphi 0, %s25
      %s26 = sphi 0, %s23
      %s27 = sphi 0, %s26
      %s43 = sphi 0, %s27
      %s47 = sphi 0, %s47
      %s49 = sphi 0, %s47
      %s50 = sphi 0, %s49
      %s64 = sphi 0, %s50
      %s70 = sphi 0, %s72
      %s73 = sphi 0, %s70
      %s74 = sphi 0, %s73
      %s90 = sphi 0, %s74
      %s96 = sphi 0, %s98
      %s99 = sphi 0, %s96
      %s100 = sphi 0, %s99
      %s116 = sphi 0, %s100
    $region4: #{tpu_custom_call.1} parent=1 // loop_header_branch
      %16 = sbr.rel (%p14) target = $region8
    $region5: #{tpu_custom_call.1} parent=1 // loop_body
      %s18 = ssub.s32 %s13, 1
      %s19 = ssub.s32 %s13, 2
      %s20 = sadd.s32 %s13, 1
      %s21 = ssub.s32 %s13, %s20
      %p22 = scmp.eq.s32.totalorder %s21, 0
      %s24 = sadd.s32 %s23, 1
      %s25 = scalar_select %p22, %s23, %s24
      %p28 = pneg %p22
      %p29 = scmp.eq.s32.totalorder %s13, 1
      %p30 = por %p28, %p29
      %p31 = scmp.ne.s32.totalorder %s23, %s26
      %p32 = scmp.eq.s32.totalorder %s13, 0
      %p33 = por %p31, %p32
      %p34 = scmp.ne.s32.totalorder %s23, %s26
      %p35 = scmp.eq.s32.totalorder %s18, 1
      %p36 = por %p34, %p35
      %p37 = scmp.ne.s32.totalorder %s26, %s27
      %p38 = scmp.eq.s32.totalorder %s18, 0
      %p39 = por %p37, %p38
      %p40 = scmp.ne.s32.totalorder %s26, %s27
      %p41 = scmp.eq.s32.totalorder %s19, 1
      %p42 = por %p40, %p41
      %p44 = scmp.ne.s32.totalorder %s27, %s43
      %p45 = scmp.eq.s32.totalorder %s19, 0
      %p46 = por %p44, %p45
      %s48 = sadd.s32 %s47, 1
      %p51 = scmp.eq.s32.totalorder %s13, 1
      %p52 = scmp.ne.s32.totalorder %s47, %s49
      %p53 = scmp.eq.s32.totalorder %s13, 0
      %p54 = por %p52, %p53
      %p55 = scmp.ne.s32.totalorder %s47, %s49
      %p56 = scmp.eq.s32.totalorder %s18, 1
      %p57 = por %p55, %p56
      %p58 = scmp.ne.s32.totalorder %s49, %s50
      %p59 = scmp.eq.s32.totalorder %s18, 0
      %p60 = por %p58, %p59
      %p61 = scmp.ne.s32.totalorder %s49, %s50
      %p62 = scmp.eq.s32.totalorder %s19, 1
      %p63 = por %p61, %p62
      %p65 = scmp.ne.s32.totalorder %s50, %s64
      %p66 = scmp.eq.s32.totalorder %s19, 0
      %p67 = por %p65, %p66
      %s68 = ssub.s32 %s13, %s20
      %p69 = scmp.eq.s32.totalorder %s68, 0
      %s71 = sadd.s32 %s70, 1
      %s72 = scalar_select %p69, %s70, %s71
      %p75 = pneg %p69
      %p76 = scmp.eq.s32.totalorder %s13, 1
      %p77 = por %p75, %p76
      %p78 = scmp.ne.s32.totalorder %s70, %s73
      %p79 = scmp.eq.s32.totalorder %s13, 0
      %p80 = por %p78, %p79
      %p81 = scmp.ne.s32.totalorder %s70, %s73
      %p82 = scmp.eq.s32.totalorder %s18, 1
      %p83 = por %p81, %p82
      %p84 = scmp.ne.s32.totalorder %s73, %s74
      %p85 = scmp.eq.s32.totalorder %s18, 0
      %p86 = por %p84, %p85
      %p87 = scmp.ne.s32.totalorder %s73, %s74
      %p88 = scmp.eq.s32.totalorder %s19, 1
      %p89 = por %p87, %p88
      %p91 = scmp.ne.s32.totalorder %s74, %s90
      %p92 = scmp.eq.s32.totalorder %s19, 0
      %p93 = por %p91, %p92
      %s94 = ssub.s32 %s13, %s20
      %p95 = scmp.eq.s32.totalorder %s94, 0
      %s97 = sadd.s32 %s96, 1
      %s98 = scalar_select %p95, %s96, %s97
      %p101 = pneg %p95
      %p102 = scmp.eq.s32.totalorder %s13, 1
      %p103 = por %p101, %p102
      %p104 = scmp.ne.s32.totalorder %s96, %s99
      %p105 = scmp.eq.s32.totalorder %s13, 0
      %p106 = por %p104, %p105
      %p107 = scmp.ne.s32.totalorder %s96, %s99
      %p108 = scmp.eq.s32.totalorder %s18, 1
      %p109 = por %p107, %p108
      %p110 = scmp.ne.s32.totalorder %s99, %s100
      %p111 = scmp.eq.s32.totalorder %s18, 0
      %p112 = por %p110, %p111
      %p113 = scmp.ne.s32.totalorder %s99, %s100
      %p114 = scmp.eq.s32.totalorder %s19, 1
      %p115 = por %p113, %p114
      %p117 = scmp.ne.s32.totalorder %s100, %s116
      %p118 = scmp.eq.s32.totalorder %s19, 0
      %p119 = por %p117, %p118
      %p120 = scmp.le.s32.totalorder 1, %s13
      %p121 = scmp.lt.s32.totalorder %s13, 3
      %p122 = pnand %p120, %p121
      %p123 = pneg %p122
      // Predicated region
      $region9: #{tpu_custom_call.1} parent=5 // pred_check
        _
      $region10: #{tpu_custom_call.1} parent=5 // pred_check_branch
        %125 = sbr.rel (%p122) target = $region12
      $region11: #{tpu_custom_call.1} parent=5 // pred_region
        %s126 = ssub.s32 %s13, 1
        // Predicated region
        $region13: #{tpu_custom_call.1} parent=11 // pred_check
          %p127 = pneg %p60
        $region14: #{tpu_custom_call.1} parent=11 // pred_check_branch
          %129 = sbr.rel (%p127) target = $region16
        $region15: #{tpu_custom_call.1} parent=11 // pred_region
          %131 = vsyncadd [#allocation3], 0
          %s132 = sshll.u32 %s1, 4
          %s133 = int_to_ptr.hbm [resolvable:$true] %s132
          %s134 = sshll.u32 [#allocation2], 4
          %s135 = int_to_ptr.vmem [resolvable:$true] %s134
          %140 = dma.hbm_to_vmem [thread:$0]  %s133, 2048, %s135, [#allocation3], 64, 64, 4
        $region16: #{tpu_custom_call.1} parent=11 // pred_fallthru
          _
      $region12: #{tpu_custom_call.1} parent=5 // pred_fallthru
        _
      %p141 = scmp.lt.s32.totalorder %s13, 2
      // Predicated region
      $region17: #{tpu_custom_call.1} parent=5 // pred_check
        %p142 = pneg %p141
      $region18: #{tpu_custom_call.1} parent=5 // pred_check_branch
        %144 = sbr.rel (%p142) target = $region20
      $region19: #{tpu_custom_call.1} parent=5 // pred_region
        // Predicated region
        $region21: #{tpu_custom_call.1} parent=19 // pred_check
          %p145 = pneg %p33
        $region22: #{tpu_custom_call.1} parent=19 // pred_check_branch
          %147 = sbr.rel (%p145) target = $region24
        $region23: #{tpu_custom_call.1} parent=19 // pred_region
          %p148 = scmp.lt.s32.totalorder %s13, 1
          %s149 = scalar_select %p148, %s13, 1
          %s150 = smul.addr %s149, 8
          %s151 = scalar_lea.vmem %s0, %s150
        $region24: #{tpu_custom_call.1} parent=19 // pred_fallthru
          _
        // Predicated region
        $region25: #{tpu_custom_call.1} parent=19 // pred_check
          %p152 = pneg %p80
        $region26: #{tpu_custom_call.1} parent=19 // pred_check_branch
          %154 = sbr.rel (%p152) target = $region28
        $region27: #{tpu_custom_call.1} parent=19 // pred_region
          %p155 = scmp.lt.s32.totalorder %s13, 1
          %s156 = scalar_select %p155, %s13, 1
          %s157 = smul.addr %s156, 8
          %s158 = scalar_lea.vmem %s2, %s157
        $region28: #{tpu_custom_call.1} parent=19 // pred_fallthru
          _
      $region20: #{tpu_custom_call.1} parent=5 // pred_fallthru
        _
      %p159 = scmp.le.s32.totalorder 1, %s13
      %p160 = scmp.lt.s32.totalorder %s13, 3
      %p161 = pnand %p159, %p160
      %p162 = pneg %p161
      // Predicated region
      $region29: #{tpu_custom_call.1} parent=5 // pred_check
        _
      $region30: #{tpu_custom_call.1} parent=5 // pred_check_branch
        %164 = sbr.rel (%p161) target = $region32
      $region31: #{tpu_custom_call.1} parent=5 // pred_region
        %s165 = ssub.s32 %s13, 1
        // Predicated region
        $region33: #{tpu_custom_call.1} parent=31 // pred_check
          %p166 = pneg %p60
        $region34: #{tpu_custom_call.1} parent=31 // pred_check_branch
          %168 = sbr.rel (%p166) target = $region36
        $region35: #{tpu_custom_call.1} parent=31 // pred_region
          %170 = dma.done [#allocation3], 2048
        $region36: #{tpu_custom_call.1} parent=31 // pred_fallthru
          _
        %p171 = scmp.lt.s32.totalorder %s18, 1
        %s172 = scalar_select %p171, %s18, 1
        %s173 = smul.addr %s172, 8
        %s174 = scalar_lea.vmem %s0, %s173
        %p175 = pneg %p39
        %p176 = pneg %p36
        %p177 = pneg %p60
        %p178 = pneg %p57
        %p179 = scmp.lt.s32.totalorder %s18, 1
        %s180 = scalar_select %p179, %s18, 1
        %s181 = smul.addr %s180, 8
        %s182 = scalar_lea.vmem %s2, %s181
        %p183 = pneg %p86
        %p184 = pneg %p83
        %p185 = pneg %p112
        %p186 = pneg %p109
        %s187 = sand.u32 %s99, 1
        %s188 = scalar_lea.sflag [#allocation4], %s187
        %s189 = sand.u32 %s99, 1
        %s190 = smul.addr %s189, 4
        %s191 = scalar_lea.vmem [#allocation5], %s190
        %p192 = scmp.lt.s32.totalorder %s18, 1
        %s193 = scalar_select %p192, %s18, 1
        %s194 = smul.addr %s193, 8
        %s195 = scalar_lea.vmem %s0, %s194
        %p196 = scmp.lt.s32.totalorder %s18, 1
        %s197 = scalar_select %p196, %s18, 1
        %s198 = smul.addr %s197, 8
        %s199 = scalar_lea.vmem %s2, %s198
        %v201 = vld [vmem:[%s195] sm:$0xff]
        %v202 = vpack.c.bf16 %v201, %v201
        %204 = vset.pattern.permute.xlu0 32
        %205 = vperm.xlu0 %204, %v202
        %v206 = vpop.permute.xlu0 %205
        %v209 = vunpack.c.l.s4 839922192
        %v210 = vunpack.c.0.s8 %v209
        %v211 = vperm.slane %v206, %v210
        %v212 = vunpack.c.l.bf16 %v211
        %v213 = vunpack.c.l.bf16 %v202
        %v214 = vmul.f32 %v212, %v213
        %v215 = vpack.c.bf16 %v214, %v214
        %216 = vset.pattern.permute.xlu0 33
        %217 = vperm.xlu0 %216, %v202
        %v218 = vpop.permute.xlu0 %217
        %v221 = vunpack.c.l.s4 839922192
        %v222 = vunpack.c.0.s8 %v221
        %v223 = vperm.slane %v218, %v222
        %v224 = vunpack.c.l.bf16 %v223
        %v225 = vmul.f32 %v224, %v213
        %v226 = vpack.c.bf16 %v225, %v225
        %227 = vset.pattern.permute.xlu0 34
        %228 = vperm.xlu0 %227, %v202
        %v229 = vpop.permute.xlu0 %228
        %v232 = vunpack.c.l.s4 839922192
        %v233 = vunpack.c.0.s8 %v232
        %v234 = vperm.slane %v229, %v233
        %v235 = vunpack.c.l.bf16 %v234
        %v236 = vmul.f32 %v235, %v213
        %v237 = vpack.c.bf16 %v236, %v236
        %238 = vset.pattern.permute.xlu0 35
        %239 = vperm.xlu0 %238, %v202
        %v240 = vpop.permute.xlu0 %239
        %v243 = vunpack.c.l.s4 839922192
        %v244 = vunpack.c.0.s8 %v243
        %v245 = vperm.slane %v240, %v244
        %v246 = vunpack.c.l.bf16 %v245
        %v247 = vmul.f32 %v246, %v213
        %v248 = vpack.c.bf16 %v247, %v247
        %v250 = vunpack.c.l.b16 %v215
        %v251 = vpack.c.b16 %v250, %v250
        %252 = vrot.lane.b32.xlu0 %v251, 32
        %v253 = vpop.permute.xlu0 %252
        %v255 = vunpack.c.l.b16 %v226
        %v256 = vpack.c.b16 %v255, %v255
        %257 = vrot.lane.b32.xlu0 %v256, 64
        %v258 = vpop.permute.xlu0 %257
        %v260 = vunpack.c.l.b16 %v237
        %v261 = vpack.c.b16 %v260, %v260
        %262 = vrot.lane.b32.xlu0 %v261, 96
        %v263 = vpop.permute.xlu0 %262
        %vm264 = vcmask 261120
        %v266 = vsel %vm264, %v202, %v253
        %vm267 = vcmask 523264
        %v269 = vsel %vm267, %v266, %v258
        %vm270 = vcmask 785408
        %v272 = vsel %vm270, %v269, %v263
        %v275 = vsel %vm264, %v248, %v202
        %vm276 = vcmask 293888
        %v278 = vsel %vm276, %v275, 0
        %v280 = vld [vmem:[#allocation2] sm:$0xf]
        %v281 = vld [vmem:[#allocation2 + $0x4] sm:$0xf]
        %v282 = vld [vmem:[#allocation2 + $0x8] sm:$0xf]
        %v283 = vld [vmem:[#allocation2 + $0xc] sm:$0xf]
        %v284 = vld [vmem:[#allocation2 + $0x10] sm:$0xf]
        %v285 = vld [vmem:[#allocation2 + $0x14] sm:$0xf]
        %v286 = vld [vmem:[#allocation2 + $0x18] sm:$0xf]
        %v287 = vld [vmem:[#allocation2 + $0x1c] sm:$0xf]
        %v288 = vld [vmem:[#allocation2 + $0x20] sm:$0xf]
        %v289 = vld [vmem:[#allocation2 + $0x24] sm:$0xf]
        %v290 = vld [vmem:[#allocation2 + $0x28] sm:$0xf]
        %v291 = vld [vmem:[#allocation2 + $0x2c] sm:$0xf]
        %v292 = vld [vmem:[#allocation2 + $0x30] sm:$0xf]
        %v293 = vld [vmem:[#allocation2 + $0x34] sm:$0xf]
        %v294 = vld [vmem:[#allocation2 + $0x38] sm:$0xf]
        %v295 = vld [vmem:[#allocation2 + $0x3c] sm:$0xf]
        %v296 = vld [vmem:[#allocation2 + $0x40] sm:$0xf]
        %v297 = vld [vmem:[#allocation2 + $0x44] sm:$0xf]
        %v298 = vld [vmem:[#allocation2 + $0x48] sm:$0xf]
        %v299 = vld [vmem:[#allocation2 + $0x4c] sm:$0xf]
        %v300 = vld [vmem:[#allocation2 + $0x50] sm:$0xf]
        %v301 = vld [vmem:[#allocation2 + $0x54] sm:$0xf]
        %v302 = vld [vmem:[#allocation2 + $0x58] sm:$0xf]
        %v303 = vld [vmem:[#allocation2 + $0x5c] sm:$0xf]
        %v304 = vld [vmem:[#allocation2 + $0x60] sm:$0xf]
        %v305 = vld [vmem:[#allocation2 + $0x64] sm:$0xf]
        %v306 = vld [vmem:[#allocation2 + $0x68] sm:$0xf]
        %v307 = vld [vmem:[#allocation2 + $0x6c] sm:$0xf]
        %v308 = vld [vmem:[#allocation2 + $0x70] sm:$0xf]
        %v309 = vld [vmem:[#allocation2 + $0x74] sm:$0xf]
        %v310 = vld [vmem:[#allocation2 + $0x78] sm:$0xf]
        %v311 = vld [vmem:[#allocation2 + $0x7c] sm:$0xf]
        %v344 = vunpack.c.l.b16 %v280
        %v345 = vunpack.c.l.b16 %v281
        %v346 = vunpack.c.l.b16 %v282
        %v347 = vunpack.c.l.b16 %v283
        %v348 = vunpack.c.l.b16 %v284
        %v349 = vunpack.c.l.b16 %v285
        %v350 = vunpack.c.l.b16 %v286
        %v351 = vunpack.c.l.b16 %v287
        %v352 = vunpack.c.l.b16 %v288
        %v353 = vunpack.c.l.b16 %v289
        %v354 = vunpack.c.l.b16 %v290
        %v355 = vunpack.c.l.b16 %v291
        %v356 = vunpack.c.l.b16 %v292
        %v357 = vunpack.c.l.b16 %v293
        %v358 = vunpack.c.l.b16 %v294
        %v359 = vunpack.c.l.b16 %v295
        %v360 = vunpack.c.l.b16 %v296
        %v361 = vunpack.c.l.b16 %v297
        %v362 = vunpack.c.l.b16 %v298
        %v363 = vunpack.c.l.b16 %v299
        %v364 = vunpack.c.l.b16 %v300
        %v365 = vunpack.c.l.b16 %v301
        %v366 = vunpack.c.l.b16 %v302
        %v367 = vunpack.c.l.b16 %v303
        %v368 = vunpack.c.l.b16 %v304
        %v369 = vunpack.c.l.b16 %v305
        %v370 = vunpack.c.l.b16 %v306
        %v371 = vunpack.c.l.b16 %v307
        %v372 = vunpack.c.l.b16 %v308
        %v373 = vunpack.c.l.b16 %v309
        %v374 = vunpack.c.l.b16 %v310
        %v375 = vunpack.c.l.b16 %v311
        %v376 = vpack.c.b16 %v345, %v344
        %v377 = vpack.c.b16 %v347, %v346
        %v378 = vpack.c.b16 %v349, %v348
        %v379 = vpack.c.b16 %v351, %v350
        %v380 = vpack.c.b16 %v353, %v352
        %v381 = vpack.c.b16 %v355, %v354
        %v382 = vpack.c.b16 %v357, %v356
        %v383 = vpack.c.b16 %v359, %v358
        %v384 = vpack.c.b16 %v361, %v360
        %v385 = vpack.c.b16 %v363, %v362
        %v386 = vpack.c.b16 %v365, %v364
        %v387 = vpack.c.b16 %v367, %v366
        %v388 = vpack.c.b16 %v369, %v368
        %v389 = vpack.c.b16 %v371, %v370
        %v390 = vpack.c.b16 %v373, %v372
        %v391 = vpack.c.b16 %v375, %v374
        %408 = vmatpush.bf16.msra.mxu0 %v383
        %409 = vmatpush.bf16.msra.mxu0 %v382
        %410 = vmatpush.bf16.msra.mxu0 %v381
        %411 = vmatpush.bf16.msra.mxu0 %v380
        %412 = vmatpush.bf16.msra.mxu0 %v379
        %413 = vmatpush.bf16.msra.mxu0 %v378
        %414 = vmatpush.bf16.msra.mxu0 %v377
        %415 = vmatpush.bf16.msra.mxu0 %v376
        %416 = vmatmul.bf16.gmra.mxu0 %v272
        %v417 = vpop.f32.mrf.mxu0
        %v418 = vadd.f32 0.0, %v417
        %v419 = vpop.f32.mrf.mxu0
        %420 = vdwg.mxu0
        %421 = vmatpush.bf16.msra.mxu0 %v391
        %422 = vmatpush.bf16.msra.mxu0 %v390
        %423 = vmatpush.bf16.msra.mxu0 %v389
        %424 = vmatpush.bf16.msra.mxu0 %v388
        %425 = vmatpush.bf16.msra.mxu0 %v387
        %426 = vmatpush.bf16.msra.mxu0 %v386
        %427 = vmatpush.bf16.msra.mxu0 %v385
        %428 = vmatpush.bf16.msra.mxu0 %v384
        %429 = vmatmul.bf16.gmra.mxu0 %v278
        %v430 = vpop.f32.mrf.mxu0
        %v431 = vadd.f32 %v418, %v430
        %v432 = vpop.f32.mrf.mxu0
        %433 = vdwg.mxu0
        %434 = vmax.xlane.f32.xlu0 %v431
        %v435 = vpop.xlane.xlu0 %434
        %v436 = vsub.f32 %v431, %v435
        %v437 = vmul.f32 %v436, 1.442695
        %v438 = vpow.pop %v437
        %v439 = vld [vmem:[%s199] sm:$0xff]
        %440 = vadd.xlane.f32.xlu0 %v438
        %v441 = vpop.xlane.xlu0 %440
        %v442 = vrcp.pop %v441
        %v443 = vmul.f32 %v441, %v442
        %v444 = vsub.f32 1.0, %v443
        %v445 = vmul.f32 %v442, %v444
        %v446 = vadd.f32 %v442, %v445
        %vm447 = vweird.f32 %v441
        %vm448 = vweird.f32 %v442
        %vm449 = vmor %vm447, %vm448
        %v450 = vsel %vm449, %v442, %v446
        %v451 = vand.u32 2147483647, %v441
        %vm452 = vcmp.eq.f32.partialorder %v451, 8.507059e+37
        %v453 = vand.u32 %v441, 2147483648
        %v454 = vor.u32 1.1754944e-38, %v453
        %v455 = vsel %vm452, %v454, %v450
        %v456 = vmul.f32 %v439, %v455
        %458 = vset.pattern.permute.xlu0 0
        %459 = vperm.xlu0 %458, %v456
        %v460 = vpop.permute.xlu0 %459
        %v462 = vmul.f32 %v438, %v460
        %v463 = vpack.c.bf16 %v462, %v462
        %464 = vst [vmem:[%s191] sm:$0xf] %v463
        %s465 = sand.u32 %s99, 1
        %s466 = scalar_lea.sflag [#allocation4], %s465
        %s467 = sand.u32 %s99, 1
        %s468 = smul.addr %s467, 4
        %s469 = scalar_lea.vmem [#allocation5], %s468
        // Predicated region
        $region37: #{tpu_custom_call.1} parent=31 // pred_check
          %p470 = pneg %p109
        $region38: #{tpu_custom_call.1} parent=31 // pred_check_branch
          %472 = sbr.rel (%p470) target = $region40
        $region39: #{tpu_custom_call.1} parent=31 // pred_region
          %474 = vsyncadd %s466, 0
          %s475 = smul.addr %s18, 4
          %s476 = scalar_lea.hbm %s3, %s475
          %s478 = sshll.u32 %s469, 4
          %s479 = int_to_ptr.vmem [resolvable:$true] %s478
          %s480 = sshll.u32 %s476, 4
          %s481 = int_to_ptr.hbm [resolvable:$true] %s480
          %483 = dma.vmem_to_hbm [thread:$0]  %s479, 64, %s481, %s466
        $region40: #{tpu_custom_call.1} parent=31 // pred_fallthru
          _
      $region32: #{tpu_custom_call.1} parent=5 // pred_fallthru
        _
      %p484 = scmp.le.s32.totalorder 2, %s13
      // Predicated region
      $region41: #{tpu_custom_call.1} parent=5 // pred_check
        %p485 = pneg %p484
      $region42: #{tpu_custom_call.1} parent=5 // pred_check_branch
        %487 = sbr.rel (%p485) target = $region44
      $region43: #{tpu_custom_call.1} parent=5 // pred_region
        %s488 = ssub.s32 %s13, 2
        // Predicated region
        $region45: #{tpu_custom_call.1} parent=43 // pred_check
          %p489 = pneg %p115
        $region46: #{tpu_custom_call.1} parent=43 // pred_check_branch
          %491 = sbr.rel (%p489) target = $region48
        $region47: #{tpu_custom_call.1} parent=43 // pred_region
          %s492 = sand.u32 %s100, 1
          %s493 = scalar_lea.sflag [#allocation4], %s492
          %s494 = sand.u32 %s100, 1
          %s495 = smul.addr %s494, 4
          %s496 = scalar_lea.vmem [#allocation5], %s495
          %498 = dma.done %s493, 64
        $region48: #{tpu_custom_call.1} parent=43 // pred_fallthru
          _
      $region44: #{tpu_custom_call.1} parent=5 // pred_fallthru
        _
    $region6: #{tpu_custom_call.1} parent=1 // loop_footer
      %s17 = sadd.s32 1, %s13
    $region7: #{tpu_custom_call.1} parent=1 // loop_footer_branch
      %12 = sbr.rel target = $region3
    $region8: #{tpu_custom_call.1} parent=1 // loop_exit
      _
    %499 = vsyncpa [#allocation3], 1
    %s500 = scalar_lea.sflag [#allocation3], 1
    %501 = vsyncpa %s500, 1
    %502 = vsyncpa [#allocation4], 1
    %s503 = scalar_lea.sflag [#allocation4], 1
    %504 = vsyncpa %s503, 1

</llo_original>
